<compile_context>
chip_gen: v7x
topology: tpu7x:2x2x1
jax: 0.10.0
libtpu: 0.0.40
codegen_flags: <defaults>
</compile_context>

<pallas_src>
import jax
import jax.numpy as jnp
from jax import lax
from jax.experimental import pallas as pl
from jax.experimental.pallas import tpu as pltpu


def linear_kernel(x_ref, w_ref, b_ref, o_ref):
    # x_ref: [tb, D], w_ref: [OUT, D], b_ref: [1, OUT], o_ref: [tb, OUT]
    acc = lax.dot_general(
        x_ref[...],
        w_ref[...],
        dimension_numbers=(((1,), (1,)), ((), ())),  # contract D with D (y = x @ W.T)
        preferred_element_type=jnp.float32,
    )
    o_ref[...] = (acc + b_ref[...]).astype(o_ref.dtype)


def _round_down8(v):
    return (v // 8) * 8


def _round_up8(v):
    return ((v + 7) // 8) * 8


def toy_model_forward(x, weight, bias, *, block_b=4096):
    """Equivalent of nn.Linear(D, OUT): y = x @ weight.T + bias.

    x:      [B, D]   float32
    weight: [OUT, D] float32  (PyTorch convention, used as-is — no transpose, no padding)
    bias:   [OUT]    float32
    returns [B, OUT] float32
    """
    B, D = x.shape
    OUT = weight.shape[0]
    b2d = bias.reshape(1, OUT).astype(jnp.float32)  # tiny; metadata-level reshape

    # --- batch-tile sizing against an explicit VMEM budget (enforced below) -------
    # Conservative budget that fits every generation once vmem_limit_bytes is raised
    # (v5e 128 MiB phys / 16 MiB default scoped; v6e 128/32; v7x 64/32).
    size_budget = 20 * 1024 * 1024          # bytes we size the tile against
    vmem_limit = 24 * 1024 * 1024           # scoped-VMEM limit handed to the compiler
    resident_bytes = 2 * (OUT * D + OUT) * 4         # weight + bias (double-buffered)
    bytes_per_row = 2 * (D + OUT) * 4                # x tile + out tile, double-buffered
    max_rows = max(8, _round_down8((size_budget - resident_bytes) // bytes_per_row))

    if B < 8:
        tb = B                                        # single full-extent block
    else:
        tb = min(block_b, max_rows, _round_down8(B))  # sublane multiple, <= B
        if B >= 16:
            # Guarantee >= 2 grid blocks so both v7x TensorCores get work.
            tb = min(tb, _round_up8(pl.cdiv(B, 2)))
        tb = max(8, _round_down8(tb))

    n_blocks = pl.cdiv(B, tb)  # last block may be ragged; Pallas masks OOB output rows

    out = pl.pallas_call(
        linear_kernel,
        out_shape=jax.ShapeDtypeStruct((B, OUT), x.dtype),
        grid=(n_blocks,),
        in_specs=[
            pl.BlockSpec((tb, D), lambda i: (i, 0)),      # streamed x tile (full rows)
            pl.BlockSpec((OUT, D), lambda i: (0, 0)),     # resident weight [OUT, D]
            pl.BlockSpec((1, OUT), lambda i: (0, 0)),     # resident bias
        ],
        out_specs=pl.BlockSpec((tb, OUT), lambda i: (i, 0)),  # narrow (B, OUT) output
        compiler_params=pltpu.CompilerParams(
            dimension_semantics=("parallel",),            # independent batch tiles
            vmem_limit_bytes=vmem_limit,
        ),
    )(x, weight.astype(x.dtype), b2d)

    return out


if __name__ == "__main__":
    # cfg.get('dim', 100) -> small dim for the toy run; out features fixed to 2.
    B, DIM, OUT = 8, 32, 2

    key = jax.random.PRNGKey(0)
    kx, kw, kb = jax.random.split(key, 3)

    x = jax.random.normal(kx, (B, DIM), dtype=jnp.float32)
    # Deterministic synthetic parameters (same shapes as nn.Linear(DIM, 2)).
    weight = jax.random.normal(kw, (OUT, DIM), dtype=jnp.float32) * 0.1
    bias = jax.random.normal(kb, (OUT,), dtype=jnp.float32) * 0.1

    y = toy_model_forward(x, weight, bias)
    y = jax.block_until_ready(y)

    # Reference check against plain JAX.
    y_ref = x @ weight.T + bias
    assert y.shape == (B, OUT)
    assert jnp.allclose(y, y_ref, atol=1e-5, rtol=1e-5)

    print("KERNEL_OK")
</pallas_src>

<mosaic_0001>
module attributes {stable_mosaic.version = 11 : i64} {
  func.func @linear_kernel(%arg0: i32, %arg1: memref<8x32xf32, #tpu.memory_space<vmem>>, %arg2: memref<2x32xf32, #tpu.memory_space<vmem>>, %arg3: memref<1x2xf32, #tpu.memory_space<vmem>>, %arg4: memref<8x2xf32, #tpu.memory_space<vmem>>) attributes {dimension_semantics = [#tpu.dimension_semantics<parallel>], iteration_bounds = array<i64: 1>, scalar_prefetch = 0 : i64, scratch_operands = 0 : i64, tpu.core_type = #tpu.core_type<tc>, window_params = [{transform_indices = @transform_0, window_bounds = array<i64: 8, 32>}, {pipeline_mode = #tpu.pipeline_mode<synchronous>, transform_indices = @transform_1, window_bounds = array<i64: 2, 32>}, {pipeline_mode = #tpu.pipeline_mode<synchronous>, transform_indices = @transform_2, window_bounds = array<i64: 1, 2>}, {transform_indices = @transform_3, window_bounds = array<i64: 8, 2>}]} {
    %c0 = arith.constant 0 : index
    %c0_0 = arith.constant 0 : index
    %0 = vector.load %arg1[%c0, %c0_0] : memref<8x32xf32, #tpu.memory_space<vmem>>, vector<8x32xf32>
    %c0_1 = arith.constant 0 : index
    %c0_2 = arith.constant 0 : index
    %1 = vector.load %arg2[%c0_1, %c0_2] : memref<2x32xf32, #tpu.memory_space<vmem>>, vector<2x32xf32>
    %cst = arith.constant dense<0.000000e+00> : vector<8x2xf32>
    %2 = tpu.matmul %0, %1, %cst {dimension_numbers = #tpu.dot_dimension_numbers<[1], [1], [0], [0], [0, 0, 1, 0], [], []>} : vector<8x32xf32>, vector<2x32xf32>, vector<8x2xf32> -> vector<8x2xf32>
    %c0_3 = arith.constant 0 : index
    %c0_4 = arith.constant 0 : index
    %3 = vector.load %arg3[%c0_3, %c0_4] : memref<1x2xf32, #tpu.memory_space<vmem>>, vector<1x2xf32>
    %4 = vector.broadcast %3 : vector<1x2xf32> to vector<8x2xf32>
    %5 = arith.addf %2, %4 : vector<8x2xf32>
    %c0_5 = arith.constant 0 : index
    %c0_6 = arith.constant 0 : index
    %6 = vector.load %arg4[%c0_5, %c0_6] : memref<8x2xf32, #tpu.memory_space<vmem>>, vector<8x2xf32>
    tpu.vector_store %arg4[%c0_5, %c0_6], %5 {strides = array<i32>} : memref<8x2xf32, #tpu.memory_space<vmem>>, vector<8x2xf32>,
    return
  }
  func.func @transform_0(%arg0: i32) -> (i32, i32) {
    %c0_i32 = arith.constant 0 : i32
    %c0_i32_0 = arith.constant 0 : i32
    return %arg0, %c0_i32 : i32, i32
  }
  func.func @transform_1(%arg0: i32) -> (i32, i32) {
    %c0_i32 = arith.constant 0 : i32
    %c0_i32_0 = arith.constant 0 : i32
    %c0_i32_1 = arith.constant 0 : i32
    return %c0_i32, %c0_i32_0 : i32, i32
  }
  func.func @transform_2(%arg0: i32) -> (i32, i32) {
    %c0_i32 = arith.constant 0 : i32
    %c0_i32_0 = arith.constant 0 : i32
    %c0_i32_1 = arith.constant 0 : i32
    return %c0_i32, %c0_i32_0 : i32, i32
  }
  func.func @transform_3(%arg0: i32) -> (i32, i32) {
    %c0_i32 = arith.constant 0 : i32
    %c0_i32_0 = arith.constant 0 : i32
    return %arg0, %c0_i32 : i32, i32
  }
}

</mosaic_0001>

<llo_original>
// kernel: tpu_custom_call.1
$region0: #{tpu_custom_call.1}
  #allocation0 [shape = 'u32[]', space=smem, size = 0x4, offset = 0x4, fixed_abs, tag = 'smem constant byte address 0x4 - core index']
  #allocation1 [shape = 'u32[144,128]{1,0:T(1,128)}', space=vmem, size = 0x12000, scoped, tag = 'internal scratch']
  %s0 = inlined_call_operand.hbm [shape: f32[8,32], index: 0, kind: input, shape index: {}]
  %s1 = inlined_call_operand.vmem [shape: f32[2,32], index: 1, kind: input, shape index: {}]
  %s2 = inlined_call_operand.vmem [shape: f32[1,2], index: 2, kind: input, shape index: {}]
  %s3 = inlined_call_operand.vmem [shape: f32[8,2], index: 3, kind: output, shape index: {}]
  %s4 = sld [smem:[#allocation0]]
  $region26: #{tpu_custom_call.1} parent=0
    _
  %s6 = ssub.s32 1, %s4
  %s7 = scalar_select 0, %s6, %s4
  $region1: #{tpu_custom_call.1} parent=0
    #allocation2 [shape = 'u8[4096]{0}', space=vmem, size = 0x1000, scoped, tag = 'input window, operand 0, single buffered']
    #allocation3 [shape = 's32[1]{0}', space=sflag, size = 0x4, scoped, tag = 'scoped memory for tpu_custom_call.1']
    %8 = vsyncpa [#allocation3], 0
    // Predicated region
    $region2: #{tpu_custom_call.1} parent=1 // pred_check
      _
    $region3: #{tpu_custom_call.1} parent=1 // pred_check_branch
      %10 = sbr.rel (0) target = $region5
    $region4: #{tpu_custom_call.1} parent=1 // pred_region
      %s12 = ssub.s32 128, 128
      %13 = vsyncadd [#allocation3], %s12
      %s15 = sshll.u32 [#allocation2], 4
      %s16 = int_to_ptr.vmem [resolvable:$true] %s15
      %18 = dma.hbm_to_vmem [thread:$0]  %s0, 128, %s16, [#allocation3]
    $region5: #{tpu_custom_call.1} parent=1 // pred_fallthru
      _
    // Predicated region
    $region6: #{tpu_custom_call.1} parent=1 // pred_check
      _
    $region7: #{tpu_custom_call.1} parent=1 // pred_check_branch
      %20 = sbr.rel (0) target = $region9
    $region8: #{tpu_custom_call.1} parent=1 // pred_region
      _
    $region9: #{tpu_custom_call.1} parent=1 // pred_fallthru
      _
    // Predicated region
    $region10: #{tpu_custom_call.1} parent=1 // pred_check
      _
    $region11: #{tpu_custom_call.1} parent=1 // pred_check_branch
      %22 = sbr.rel (0) target = $region13
    $region12: #{tpu_custom_call.1} parent=1 // pred_region
      _
    $region13: #{tpu_custom_call.1} parent=1 // pred_fallthru
      _
    // Predicated region
    $region14: #{tpu_custom_call.1} parent=1 // pred_check
      _
    $region15: #{tpu_custom_call.1} parent=1 // pred_check_branch
      %24 = sbr.rel (0) target = $region17
    $region16: #{tpu_custom_call.1} parent=1 // pred_region
      %25 = dma.done [#allocation3], 128
    $region17: #{tpu_custom_call.1} parent=1 // pred_fallthru
      _
    %v26 = vld [vmem:[#allocation2] sm:$0xff]
    %v27 = vld [vmem:[%s1] sm:$0x3]
    %v28 = vld [vmem:[%s2] sm:$0x1]
    %v30 = vlaneseq
    %v31 = vshrl.u32 %v30, 7
    %v32 = vsub.s32 0, %v31
    %v33 = vrot.slane %v28, %v32
    %vm35 = vcmask 261120
    %v37 = vsel %vm35, %v26, 0
    %v40 = vsel %vm35, %v27, 0
    %42 = vmatprep.subr.mxu0 0.0
    %43 = vmatpush1.xpose.msra.mxu0 %v40
    %44 = vmatprep.subr.mxu0 0.0
    %45 = vmatpush1.xpose.msra.mxu0 0.0
    %46 = vmatprep.subr.mxu0 0.0
    %47 = vmatpush1.xpose.msra.mxu0 0.0
    %48 = vmatprep.subr.mxu0 0.0
    %49 = vmatpush1.xpose.msra.mxu0 0.0
    %50 = vmatprep.subr.mxu0 0.0
    %51 = vmatpush1.xpose.msra.mxu0 0.0
    %52 = vmatprep.subr.mxu0 0.0
    %53 = vmatpush1.xpose.msra.mxu0 0.0
    %54 = vmatprep.subr.mxu0 0.0
    %55 = vmatpush1.xpose.msra.mxu0 0.0
    %56 = vmatprep.subr.mxu0 0.0
    %57 = vmatpush1.xpose.msra.mxu0 0.0
    %58 = vmatprep.subr.mxu0 0.0
    %59 = vmatpush1.xpose.msra.mxu0 0.0
    %60 = vmatprep.subr.mxu0 0.0
    %61 = vmatpush1.xpose.msra.mxu0 0.0
    %62 = vmatprep.subr.mxu0 0.0
    %63 = vmatpush1.xpose.msra.mxu0 0.0
    %64 = vmatprep.subr.mxu0 0.0
    %65 = vmatpush1.xpose.msra.mxu0 0.0
    %66 = vmatprep.subr.mxu0 0.0
    %67 = vmatpush1.xpose.msra.mxu0 0.0
    %68 = vmatprep.subr.mxu0 0.0
    %69 = vmatpush1.xpose.msra.mxu0 0.0
    %70 = vmatprep.subr.mxu0 0.0
    %71 = vmatpush1.xpose.msra.mxu0 0.0
    %72 = vmatprep.subr.mxu0 0.0
    %73 = vmatpush1.xpose.msra.mxu0 0.0
    %74 = vmatprep.subr.mxu0 0.0
    %75 = vmatpush1.xpose.msra.mxu0 0.0
    %76 = vmatprep.subr.mxu0 0.0
    %77 = vmatpush1.xpose.msra.mxu0 0.0
    %78 = vmatprep.subr.mxu0 0.0
    %79 = vmatpush1.xpose.msra.mxu0 0.0
    %80 = vmatprep.subr.mxu0 0.0
    %81 = vmatpush1.xpose.msra.mxu0 0.0
    %82 = vmatprep.subr.mxu0 0.0
    %83 = vmatpush1.xpose.msra.mxu0 0.0
    %84 = vmatprep.subr.mxu0 0.0
    %85 = vmatpush1.xpose.msra.mxu0 0.0
    %86 = vmatprep.subr.mxu0 0.0
    %87 = vmatpush1.xpose.msra.mxu0 0.0
    %88 = vmatprep.subr.mxu0 0.0
    %89 = vmatpush1.xpose.msra.mxu0 0.0
    %90 = vmatprep.subr.mxu0 0.0
    %91 = vmatpush1.xpose.msra.mxu0 0.0
    %92 = vmatprep.subr.mxu0 0.0
    %93 = vmatpush1.xpose.msra.mxu0 0.0
    %94 = vmatprep.subr.mxu0 0.0
    %95 = vmatpush1.xpose.msra.mxu0 0.0
    %96 = vmatprep.subr.mxu0 0.0
    %97 = vmatpush1.xpose.msra.mxu0 0.0
    %98 = vmatprep.subr.mxu0 0.0
    %99 = vmatpush1.xpose.msra.mxu0 0.0
    %100 = vmatprep.subr.mxu0 0.0
    %101 = vmatpush1.xpose.msra.mxu0 0.0
    %102 = vmatprep.subr.mxu0 0.0
    %103 = vmatpush1.xpose.msra.mxu0 0.0
    %104 = vmatprep.subr.mxu0 0.0
    %105 = vmatpush1.xpose.msra.mxu0 0.0
    %106 = vmatprep.mubr.f32.mxu0 0.0
    %107 = vmatmul.mubr.f32.gmra.mrb[0].mxu0 %v37
    %v108 = vpop.f32.mrb[0].mxu0
    %v109 = vadd.f32 %v33, %v108
    %v110 = vpop.f32.mrb[0].mxu0
    %111 = vdwg.mxu0
    %vm112 = vcmask 15360
    %113 = vst.msk [vmem:[%s3] sm:$0xff] %vm112, %v109
    // Predicated region
    $region18: #{tpu_custom_call.1} parent=1 // pred_check
      _
    $region19: #{tpu_custom_call.1} parent=1 // pred_check_branch
      %115 = sbr.rel (0) target = $region21
    $region20: #{tpu_custom_call.1} parent=1 // pred_region
      _
    $region21: #{tpu_custom_call.1} parent=1 // pred_fallthru
      _
    // Predicated region
    $region22: #{tpu_custom_call.1} parent=1 // pred_check
      _
    $region23: #{tpu_custom_call.1} parent=1 // pred_check_branch
      %117 = sbr.rel (0) target = $region25
    $region24: #{tpu_custom_call.1} parent=1 // pred_region
      _
    $region25: #{tpu_custom_call.1} parent=1 // pred_fallthru
      _
    %118 = vsyncpa [#allocation3], 1

</llo_original>
